<compile_context>
chip_gen: v7x
topology: tpu7x:2x2x1
jax: 0.10.0
libtpu: 0.0.40
codegen_flags: <defaults>
</compile_context>

<pallas_src>
import jax
import jax.numpy as jnp
from jax.experimental import pallas as pl
from jax.experimental.pallas import tpu as pltpu


def _round_up(x, m):
    return ((x + m - 1) // m) * m


# ----------------------------- fused kernel -----------------------------------
def _oh_fused_kernel(ids_ref, labels_ref,              # scalar-prefetch (SMEM)
                     w1row_ref, b1_ref, w2l_ref, b2_ref,   # inputs  (VMEM tiles)
                     logits_ref, loss_ref, pred_ref,       # outputs (VMEM, lane-dense)
                     acc_ref):                              # scratch (VMEM)
    # ids_ref:    (B*L,)     int32  token ids (used only by the index_map; unused here)
    # labels_ref: (B,)       int32  class labels
    # w1row_ref:  (1, 1, H)  bf16   gathered row W1^T[id_{b,l}]
    # b1_ref:     (1, H)     f32
    # w2l_ref:    (1, H, NC) bf16   position-l slab of W2^T (compact, no lane padding)
    # b2_ref:     (1, NC)    f32
    # logits_ref: (1, 1, NCP) f32   padded logits for example b (lane-dense store)
    # loss_ref:   (1, 1, NCP) f32   per-example CE loss, broadcast across lanes
    # pred_ref:   (1, 1, NCP) i32   per-example argmax, broadcast across lanes
    # acc_ref:    (1, NC)    f32    fc2 accumulator over positions l
    del ids_ref
    b = pl.program_id(0)
    l = pl.program_id(1)
    last_l = pl.num_programs(1) - 1
    NC = b2_ref.shape[1]

    @pl.when(l == 0)
    def _init():
        acc_ref[...] = b2_ref[...]

    # fc1 for token (b, l): the input row is exactly one-hot, so fc1 is just the gathered
    # W1^T row (DMA'd by the index_map) + bias, then ReLU.  No (B,C)@(C,H) matmul at all.
    h = jnp.maximum(w1row_ref[0].astype(jnp.float32) + b1_ref[...], 0.0)       # (1, H) f32

    # fc2 contribution of position l (flatten == rows [l*H,(l+1)*H) of W2^T == w2t[l]).
    partial = jnp.dot(h.astype(jnp.bfloat16), w2l_ref[0],
                      preferred_element_type=jnp.float32)                       # (1, NC) f32
    acc_ref[...] += partial

    @pl.when(l == last_l)
    def _finalize():
        logits = acc_ref[...]                                                   # (1, NC) f32
        lane = jax.lax.broadcasted_iota(jnp.int32, (1, NC), 1)

        # Cross-entropy for example b (mean over batch is done by the caller so the batch
        # grid axis can stay "parallel" for v7x megacore).
        m = jnp.max(logits, axis=-1, keepdims=True)                             # (1, 1)
        lse = jnp.log(jnp.sum(jnp.exp(logits - m), axis=-1, keepdims=True)) + m
        tgt = jnp.sum(jnp.where(lane == labels_ref[b], logits, 0.0),
                      axis=-1, keepdims=True)
        loss_ref[...] = jnp.broadcast_to(lse - tgt, loss_ref.shape)

        # Fused argmax (index of first maximal logit, matching torch.argmax).
        pred = jnp.min(jnp.where(logits == m, lane, NC), axis=-1, keepdims=True)
        pred_ref[...] = jnp.broadcast_to(pred, pred_ref.shape)

        # Lane-dense padded logits store.
        logits_ref[...] = jnp.zeros_like(logits_ref)
        logits_ref[:, :, 0:NC] = logits[None]


# ----------------------------- params -----------------------------------
def init_oh_model(key, curpus_len, hidden_num, num_class, max_len):
    """torch.nn.Linear-style init (uniform +-1/sqrt(fan_in)), stored kernel-ready."""
    assert num_class <= 128
    k1, k2, k3, k4 = jax.random.split(key, 4)
    bound1 = 1.0 / (curpus_len ** 0.5)
    bound2 = 1.0 / ((hidden_num * max_len) ** 0.5)
    w1 = jax.random.uniform(k1, (hidden_num, curpus_len), jnp.float32, -bound1, bound1)
    b1 = jax.random.uniform(k2, (hidden_num,), jnp.float32, -bound1, bound1)
    w2 = jax.random.uniform(k3, (num_class, hidden_num * max_len), jnp.float32, -bound2, bound2)
    b2 = jax.random.uniform(k4, (num_class,), jnp.float32, -bound2, bound2)
    return {
        # (C, 1, H) bf16: pre-transposed fc1 weight; singleton middle dim keeps the per-row
        # gather block (1, 1, H) compliant with the (8,128) block-shape rules.
        "w1t": w1.T.reshape(curpus_len, 1, hidden_num).astype(jnp.bfloat16),
        "b1": b1.reshape(1, hidden_num),                                        # (1, H) f32
        # (L, H, NC) bf16: w2t[l] == W2^T rows [l*H, (l+1)*H) — "flatten" is just this
        # per-position slab; stored compactly (no 128-lane padding of HBM bytes).
        "w2t": w2.T.reshape(max_len, hidden_num, num_class).astype(jnp.bfloat16),
        "b2": b2.reshape(1, num_class),                                         # (1, NC) f32
    }


# ----------------------------- forward -----------------------------------
def _fused_call(params, token_ids, labels):
    B, L = token_ids.shape
    C, _, H = params["w1t"].shape
    Lw, Hw, NC = params["w2t"].shape
    assert (Lw, Hw) == (L, H), "w2 shape inconsistent with (max_len, hidden_num)"
    NCP = _round_up(NC, 128)

    in_specs = [
        # W1^T (C, 1, H): only the row for token id[b, l] is DMA'd per grid step.
        pl.BlockSpec((1, 1, H), lambda b, l, ids, lab: (ids[b * L + l], 0, 0)),
        pl.BlockSpec((1, H), lambda b, l, ids, lab: (0, 0)),
        # W2^T (L, H, NC): position l's slab, streamed per step (auto double-buffered).
        pl.BlockSpec((1, H, NC), lambda b, l, ids, lab: (l, 0, 0)),
        pl.BlockSpec((1, NC), lambda b, l, ids, lab: (0, 0)),
    ]
    out_specs = (
        pl.BlockSpec((1, 1, NCP), lambda b, l, ids, lab: (b, 0, 0)),
        pl.BlockSpec((1, 1, NCP), lambda b, l, ids, lab: (b, 0, 0)),
        pl.BlockSpec((1, 1, NCP), lambda b, l, ids, lab: (b, 0, 0)),
    )
    out_shape = (
        jax.ShapeDtypeStruct((B, 1, NCP), jnp.float32),   # padded logits
        jax.ShapeDtypeStruct((B, 1, NCP), jnp.float32),   # per-example CE loss (lane bcast)
        jax.ShapeDtypeStruct((B, 1, NCP), jnp.int32),     # argmax pred (lane bcast)
    )

    return pl.pallas_call(
        _oh_fused_kernel,
        out_shape=out_shape,
        grid_spec=pltpu.PrefetchScalarGridSpec(
            num_scalar_prefetch=2,
            grid=(B, L),
            in_specs=in_specs,
            out_specs=out_specs,
            scratch_shapes=[pltpu.VMEM((1, NC), jnp.float32)],
        ),
        compiler_params=pltpu.CompilerParams(
            # Batch axis across TensorCores (v7x); position axis is the fc2 reduction.
            dimension_semantics=("parallel", "arbitrary"),
            # Tiled-gather design needs only KBs of VMEM per step; 32 MiB is ample headroom
            # on all generations (v7x: 64 MiB physical, v5e/v6e: 128 MiB).
            vmem_limit_bytes=32 * 1024 * 1024,
        ),
    )(token_ids.reshape(-1).astype(jnp.int32), labels.reshape(-1).astype(jnp.int32),
      params["w1t"], params["b1"], params["w2t"], params["b2"])


@jax.jit
def oh_model_forward(params, token_ids, labels):
    """Preferred interface: token ids instead of the materialized one-hot tensor."""
    NC = params["w2t"].shape[-1]
    logits_pad, loss_pe, pred_pe = _fused_call(params, token_ids, labels)
    logits = logits_pad[:, 0, :NC]
    loss = jnp.mean(loss_pe[:, 0, 0])     # tiny (B,) reduce; kept outside so batch stays "parallel"
    pred = pred_pe[:, 0, 0]               # torch's .detach().cpu().numpy().tolist() left to caller
    return loss, logits, pred


@jax.jit
def oh_model_forward_onehot(params, txets_onehot, labels):
    """Original nn.Module interface (txets_onehot: [B, maxLen, curpus_len]). Rows are genuine
    one-hots, so recovering ids with argmax is exact and the fused kernel is equivalent."""
    token_ids = jnp.argmax(txets_onehot, axis=-1).astype(jnp.int32)
    return oh_model_forward(params, token_ids, labels)


# ----------------------------- demo -----------------------------------
if __name__ == "__main__":
    B, MAX_LEN, CURPUS_LEN, HIDDEN, NUM_CLASS = 2, 8, 32, 32, 4

    key = jax.random.PRNGKey(0)
    k_param, k_tok, k_lab = jax.random.split(key, 3)

    params = init_oh_model(k_param, CURPUS_LEN, HIDDEN, NUM_CLASS, MAX_LEN)
    token_ids = jax.random.randint(k_tok, (B, MAX_LEN), 0, CURPUS_LEN, dtype=jnp.int32)
    labels = jax.random.randint(k_lab, (B,), 0, NUM_CLASS, dtype=jnp.int32)

    loss, logits, pred = oh_model_forward(params, token_ids, labels)
    jax.block_until_ready((loss, logits, pred))

    # Plain-JAX reference replicating the PyTorch module (f32 compute on the same stored
    # bf16 weights; the kernel's bf16 activation cast is the only divergence -> loose atol).
    onehot = jax.nn.one_hot(token_ids, CURPUS_LEN, dtype=jnp.float32)            # [B, L, C]
    w1t_f = params["w1t"].astype(jnp.float32).reshape(CURPUS_LEN, HIDDEN)        # (C, H)
    b1_f = params["b1"][0]
    w2t_f = params["w2t"].astype(jnp.float32).reshape(MAX_LEN * HIDDEN, NUM_CLASS)
    b2_f = params["b2"][0]
    ref_h = jnp.maximum(jnp.einsum("blc,ch->blh", onehot, w1t_f) + b1_f, 0.0)
    ref_logits = ref_h.reshape(B, -1) @ w2t_f + b2_f
    ref_loss = jnp.mean(jax.nn.logsumexp(ref_logits, axis=-1)
                        - ref_logits[jnp.arange(B), labels])

    assert jnp.allclose(logits, ref_logits, atol=2e-2), "logits mismatch"
    assert jnp.allclose(loss, ref_loss, atol=2e-2), "loss mismatch"
    assert jnp.array_equal(pred, jnp.argmax(logits, axis=-1)), "pred mismatch"

    # Original (one-hot tensor) interface produces identical results.
    loss2, logits2, pred2 = oh_model_forward_onehot(params, onehot, labels)
    jax.block_until_ready((loss2, logits2, pred2))
    assert jnp.allclose(logits2, logits, atol=1e-6), "one-hot interface logits mismatch"
    assert jnp.allclose(loss2, loss, atol=1e-6), "one-hot interface loss mismatch"
    assert jnp.array_equal(pred2, pred), "one-hot interface pred mismatch"

    print("KERNEL_OK")
</pallas_src>

<mosaic_0001>
module attributes {stable_mosaic.version = 11 : i64} {
  func.func @_oh_fused_kernel(%arg0: i32, %arg1: i32, %arg2: memref<16xi32, #tpu.memory_space<smem>>, %arg3: memref<2xi32, #tpu.memory_space<smem>>, %arg4: memref<1x1x32xbf16, #tpu.memory_space<vmem>>, %arg5: memref<1x32xf32, #tpu.memory_space<vmem>>, %arg6: memref<1x32x4xbf16, #tpu.memory_space<vmem>>, %arg7: memref<1x4xf32, #tpu.memory_space<vmem>>, %arg8: memref<1x1x128xf32, #tpu.memory_space<vmem>>, %arg9: memref<1x1x128xf32, #tpu.memory_space<vmem>>, %arg10: memref<1x1x128xi32, #tpu.memory_space<vmem>>, %arg11: memref<1x4xf32, #tpu.memory_space<vmem>>) attributes {dimension_semantics = [#tpu.dimension_semantics<parallel>, #tpu.dimension_semantics<arbitrary>], iteration_bounds = array<i64: 2, 8>, scalar_prefetch = 2 : i64, scratch_operands = 1 : i64, tpu.core_type = #tpu.core_type<tc>, window_params = [{transform_indices = @transform_0, window_bounds = array<i64: 1, 1, 32>}, {pipeline_mode = #tpu.pipeline_mode<synchronous>, transform_indices = @transform_1, window_bounds = array<i64: 1, 32>}, {transform_indices = @transform_2, window_bounds = array<i64: 1, 32, 4>}, {pipeline_mode = #tpu.pipeline_mode<synchronous>, transform_indices = @transform_3, window_bounds = array<i64: 1, 4>}, {transform_indices = @transform_4, window_bounds = array<i64: 1, 1, 128>}, {transform_indices = @transform_5, window_bounds = array<i64: 1, 1, 128>}, {transform_indices = @transform_6, window_bounds = array<i64: 1, 1, 128>}]} {
    %c0_i32 = arith.constant 0 : i32
    %0 = arith.cmpi eq, %arg1, %c0_i32 : i32
    %1 = arith.extui %0 : i1 to i32
    %c0_i32_0 = arith.constant 0 : i32
    %2 = arith.cmpi ne, %1, %c0_i32_0 : i32
    scf.if %2 {
      %c0_14 = arith.constant 0 : index
      %c0_15 = arith.constant 0 : index
      %20 = vector.load %arg7[%c0_14, %c0_15] : memref<1x4xf32, #tpu.memory_space<vmem>>, vector<1x4xf32>
      %c0_16 = arith.constant 0 : index
      %c0_17 = arith.constant 0 : index
      %21 = vector.load %arg11[%c0_16, %c0_17] : memref<1x4xf32, #tpu.memory_space<vmem>>, vector<1x4xf32>
      tpu.vector_store %arg11[%c0_16, %c0_17], %20 {strides = array<i32>} : memref<1x4xf32, #tpu.memory_space<vmem>>, vector<1x4xf32>,
    } else {
    }
    %c0 = arith.constant 0 : index
    %c0_1 = arith.constant 0 : index
    %c0_2 = arith.constant 0 : index
    %3 = vector.load %arg4[%c0, %c0_1, %c0_2] : memref<1x1x32xbf16, #tpu.memory_space<vmem>>, vector<1x1x32xbf16>
    %4 = vector.shape_cast %3 : vector<1x1x32xbf16> to vector<1x32xbf16>
    %5 = arith.extf %4 : vector<1x32xbf16> to vector<1x32xf32>
    %c0_3 = arith.constant 0 : index
    %c0_4 = arith.constant 0 : index
    %6 = vector.load %arg5[%c0_3, %c0_4] : memref<1x32xf32, #tpu.memory_space<vmem>>, vector<1x32xf32>
    %7 = arith.addf %5, %6 : vector<1x32xf32>
    %cst = arith.constant 0.000000e+00 : f32
    %8 = vector.broadcast %cst : f32 to vector<1x32xf32>
    %9 = arith.maximumf %7, %8 : vector<1x32xf32>
    %10 = arith.truncf %9 : vector<1x32xf32> to vector<1x32xbf16>
    %c0_5 = arith.constant 0 : index
    %c0_6 = arith.constant 0 : index
    %c0_7 = arith.constant 0 : index
    %11 = vector.load %arg6[%c0_5, %c0_6, %c0_7] : memref<1x32x4xbf16, #tpu.memory_space<vmem>>, vector<1x32x4xbf16>
    %12 = vector.shape_cast %11 : vector<1x32x4xbf16> to vector<32x4xbf16>
    %cst_8 = arith.constant dense<0.000000e+00> : vector<1x4xf32>
    %13 = tpu.matmul %10, %12, %cst_8 {dimension_numbers = #tpu.dot_dimension_numbers<[1], [0], [0], [1], [0, 0, 1, 1], [], []>} : vector<1x32xbf16>, vector<32x4xbf16>, vector<1x4xf32> -> vector<1x4xf32>
    %c0_9 = arith.constant 0 : index
    %c0_10 = arith.constant 0 : index
    %14 = vector.load %arg11[%c0_9, %c0_10] : memref<1x4xf32, #tpu.memory_space<vmem>>, vector<1x4xf32>
    %15 = arith.addf %14, %13 : vector<1x4xf32>
    %c0_11 = arith.constant 0 : index
    %c0_12 = arith.constant 0 : index
    %16 = vector.load %arg11[%c0_11, %c0_12] : memref<1x4xf32, #tpu.memory_space<vmem>>, vector<1x4xf32>
    tpu.vector_store %arg11[%c0_11, %c0_12], %15 {strides = array<i32>} : memref<1x4xf32, #tpu.memory_space<vmem>>, vector<1x4xf32>,
    %c7_i32 = arith.constant 7 : i32
    %17 = arith.cmpi eq, %arg1, %c7_i32 : i32
    %18 = arith.extui %17 : i1 to i32
    %c0_i32_13 = arith.constant 0 : i32
    %19 = arith.cmpi ne, %18, %c0_i32_13 : i32
    scf.if %19 {
      %c0_14 = arith.constant 0 : index
      %c0_15 = arith.constant 0 : index
      %20 = vector.load %arg11[%c0_14, %c0_15] : memref<1x4xf32, #tpu.memory_space<vmem>>, vector<1x4xf32>
      %21 = tpu.iota {dimensions = array<i32: 1>} : vector<1x4xi32>
      %cst_16 = arith.constant dense<0xFF800000> : vector<1xf32>
      %22 = vector.multi_reduction <maximumf>, %20, %cst_16 [1] : vector<1x4xf32> to vector<1xf32>
      %23 = vector.shape_cast %22 : vector<1xf32> to vector<1x1xf32>
      %24 = vector.broadcast %23 : vector<1x1xf32> to vector<1x4xf32>
      %25 = arith.subf %20, %24 : vector<1x4xf32>
      %26 = math.exp %25 : vector<1x4xf32>
      %cst_17 = arith.constant dense<0.000000e+00> : vector<1xf32>
      %27 = vector.multi_reduction <add>, %26, %cst_17 [1] : vector<1x4xf32> to vector<1xf32>
      %28 = vector.shape_cast %27 : vector<1xf32> to vector<1x1xf32>
      %29 = math.log %28 : vector<1x1xf32>
      %30 = arith.addf %29, %23 : vector<1x1xf32>
      %31 = arith.index_cast %arg0 : i32 to index
      %32 = memref.load %arg3[%31] : memref<2xi32, #tpu.memory_space<smem>>
      %33 = vector.broadcast %32 : i32 to vector<1x4xi32>
      %34 = arith.cmpi eq, %21, %33 : vector<1x4xi32>
      %cst_18 = arith.constant 0.000000e+00 : f32
      %35 = vector.broadcast %cst_18 : f32 to vector<1x4xf32>
      %36 = arith.select %34, %20, %35 : vector<1x4xi1>, vector<1x4xf32>
      %cst_19 = arith.constant dense<0.000000e+00> : vector<1xf32>
      %37 = vector.multi_reduction <add>, %36, %cst_19 [1] : vector<1x4xf32> to vector<1xf32>
      %38 = vector.shape_cast %37 : vector<1xf32> to vector<1x1xf32>
      %39 = arith.subf %30, %38 : vector<1x1xf32>
      %40 = vector.shape_cast %39 : vector<1x1xf32> to vector<1x1x1xf32>
      %41 = vector.broadcast %40 : vector<1x1x1xf32> to vector<1x1x128xf32>
      %c0_20 = arith.constant 0 : index
      %c0_21 = arith.constant 0 : index
      %c0_22 = arith.constant 0 : index
      %42 = vector.load %arg9[%c0_20, %c0_21, %c0_22] : memref<1x1x128xf32, #tpu.memory_space<vmem>>, vector<1x1x128xf32>
      tpu.vector_store %arg9[%c0_20, %c0_21, %c0_22], %41 {strides = array<i32>} : memref<1x1x128xf32, #tpu.memory_space<vmem>>, vector<1x1x128xf32>,
      %43 = vector.broadcast %23 : vector<1x1xf32> to vector<1x4xf32>
      %44 = arith.cmpf oeq, %20, %43 : vector<1x4xf32>
      %c4_i32 = arith.constant 4 : i32
      %45 = vector.broadcast %c4_i32 : i32 to vector<1x4xi32>
      %46 = arith.select %44, %21, %45 : vector<1x4xi1>, vector<1x4xi32>
      %cst_23 = arith.constant dense<2147483647> : vector<1xi32>
      %47 = vector.multi_reduction <minsi>, %46, %cst_23 [1] : vector<1x4xi32> to vector<1xi32>
      %48 = vector.shape_cast %47 : vector<1xi32> to vector<1x1xi32>
      %49 = vector.shape_cast %48 : vector<1x1xi32> to vector<1x1x1xi32>
      %50 = vector.broadcast %49 : vector<1x1x1xi32> to vector<1x1x128xi32>
      %c0_24 = arith.constant 0 : index
      %c0_25 = arith.constant 0 : index
      %c0_26 = arith.constant 0 : index
      %51 = vector.load %arg10[%c0_24, %c0_25, %c0_26] : memref<1x1x128xi32, #tpu.memory_space<vmem>>, vector<1x1x128xi32>
      tpu.vector_store %arg10[%c0_24, %c0_25, %c0_26], %50 {strides = array<i32>} : memref<1x1x128xi32, #tpu.memory_space<vmem>>, vector<1x1x128xi32>,
      %cst_27 = arith.constant 0.000000e+00 : f32
      %52 = vector.broadcast %cst_27 : f32 to vector<1x1x128xf32>
      %c0_28 = arith.constant 0 : index
      %c0_29 = arith.constant 0 : index
      %c0_30 = arith.constant 0 : index
      %53 = vector.load %arg8[%c0_28, %c0_29, %c0_30] : memref<1x1x128xf32, #tpu.memory_space<vmem>>, vector<1x1x128xf32>
      tpu.vector_store %arg8[%c0_28, %c0_29, %c0_30], %52 {strides = array<i32>} : memref<1x1x128xf32, #tpu.memory_space<vmem>>, vector<1x1x128xf32>,
      %54 = vector.shape_cast %20 : vector<1x4xf32> to vector<1x1x4xf32>
      %c0_31 = arith.constant 0 : index
      %c0_32 = arith.constant 0 : index
      %c0_33 = arith.constant 0 : index
      %55 = vector.load %arg8[%c0_31, %c0_32, %c0_33] : memref<1x1x128xf32, #tpu.memory_space<vmem>>, vector<1x1x4xf32>
      tpu.vector_store %arg8[%c0_31, %c0_32, %c0_33], %54 {strides = array<i32>} : memref<1x1x128xf32, #tpu.memory_space<vmem>>, vector<1x1x4xf32>,
    } else {
    }
    return
  }
  func.func @transform_0(%arg0: i32, %arg1: i32, %arg2: memref<16xi32, #tpu.memory_space<smem>>, %arg3: memref<2xi32, #tpu.memory_space<smem>>) -> (i32, i32, i32) {
    %c8_i32 = arith.constant 8 : i32
    %0 = arith.muli %arg0, %c8_i32 : i32
    %1 = arith.addi %0, %arg1 : i32
    %2 = arith.index_cast %1 : i32 to index
    %3 = memref.load %arg2[%2] : memref<16xi32, #tpu.memory_space<smem>>
    %c0_i32 = arith.constant 0 : i32
    %c0_i32_0 = arith.constant 0 : i32
    %c0_i32_1 = arith.constant 0 : i32
    return %3, %c0_i32, %c0_i32_0 : i32, i32, i32
  }
  func.func @transform_1(%arg0: i32, %arg1: i32, %arg2: memref<16xi32, #tpu.memory_space<smem>>, %arg3: memref<2xi32, #tpu.memory_space<smem>>) -> (i32, i32) {
    %c0_i32 = arith.constant 0 : i32
    %c0_i32_0 = arith.constant 0 : i32
    %c0_i32_1 = arith.constant 0 : i32
    return %c0_i32, %c0_i32_0 : i32, i32
  }
  func.func @transform_2(%arg0: i32, %arg1: i32, %arg2: memref<16xi32, #tpu.memory_space<smem>>, %arg3: memref<2xi32, #tpu.memory_space<smem>>) -> (i32, i32, i32) {
    %c0_i32 = arith.constant 0 : i32
    %c0_i32_0 = arith.constant 0 : i32
    %c0_i32_1 = arith.constant 0 : i32
    return %arg1, %c0_i32, %c0_i32_0 : i32, i32, i32
  }
  func.func @transform_3(%arg0: i32, %arg1: i32, %arg2: memref<16xi32, #tpu.memory_space<smem>>, %arg3: memref<2xi32, #tpu.memory_space<smem>>) -> (i32, i32) {
    %c0_i32 = arith.constant 0 : i32
    %c0_i32_0 = arith.constant 0 : i32
    %c0_i32_1 = arith.constant 0 : i32
    return %c0_i32, %c0_i32_0 : i32, i32
  }
  func.func @transform_4(%arg0: i32, %arg1: i32, %arg2: memref<16xi32, #tpu.memory_space<smem>>, %arg3: memref<2xi32, #tpu.memory_space<smem>>) -> (i32, i32, i32) {
    %c0_i32 = arith.constant 0 : i32
    %c0_i32_0 = arith.constant 0 : i32
    %c0_i32_1 = arith.constant 0 : i32
    return %arg0, %c0_i32, %c0_i32_0 : i32, i32, i32
  }
  func.func @transform_5(%arg0: i32, %arg1: i32, %arg2: memref<16xi32, #tpu.memory_space<smem>>, %arg3: memref<2xi32, #tpu.memory_space<smem>>) -> (i32, i32, i32) {
    %c0_i32 = arith.constant 0 : i32
    %c0_i32_0 = arith.constant 0 : i32
    %c0_i32_1 = arith.constant 0 : i32
    return %arg0, %c0_i32, %c0_i32_0 : i32, i32, i32
  }
  func.func @transform_6(%arg0: i32, %arg1: i32, %arg2: memref<16xi32, #tpu.memory_space<smem>>, %arg3: memref<2xi32, #tpu.memory_space<smem>>) -> (i32, i32, i32) {
    %c0_i32 = arith.constant 0 : i32
    %c0_i32_0 = arith.constant 0 : i32
    %c0_i32_1 = arith.constant 0 : i32
    return %arg0, %c0_i32, %c0_i32_0 : i32, i32, i32
  }
}

</mosaic_0001>

<llo_original>
// kernel: oh_model_forward.1
$region0: #{oh_model_forward.1}
  #allocation0 [shape = 'u32[]', space=smem, size = 0x4, offset = 0x4, fixed_abs, tag = 'smem constant byte address 0x4 - core index']
  #allocation1 [shape = 'u32[144,128]{1,0:T(1,128)}', space=vmem, size = 0x12000, scoped, tag = 'internal scratch']
  #allocation2 [shape = 'f32[1,4]{1,0:T(1,128)}', space=vmem, size = 0x200, scoped, tag = 'scratch operand']
  #allocation3 [shape = 's32[1]{0}', space=sflag, size = 0x4, scoped, tag = 'scoped memory for oh_model_forward.1']
  #allocation4 [shape = 'u8[512]{0}', space=smem, size = 0x200, scoped, tag = 'prefetched SMEM operand 0']
  #allocation5 [shape = 'u8[512]{0}', space=smem, size = 0x200, scoped, tag = 'prefetched SMEM operand 1']
  %s0 = inlined_call_operand.vmem [shape: s32[16], index: 0, kind: input, shape index: {}]
  %s1 = inlined_call_operand.vmem [shape: s32[2], index: 1, kind: input, shape index: {}]
  %s2 = inlined_call_operand.vmem [shape: bf16[32,1,32], index: 2, kind: input, shape index: {}]
  %s3 = inlined_call_operand.vmem [shape: f32[1,32], index: 3, kind: input, shape index: {}]
  %s4 = inlined_call_operand.vmem [shape: bf16[8,32,4], index: 4, kind: input, shape index: {}]
  %s5 = inlined_call_operand.vmem [shape: f32[1,4], index: 5, kind: input, shape index: {}]
  %s6 = inlined_call_operand.hbm [shape: f32[2,1,128], index: 6, kind: output, shape index: {0}]
  %s7 = inlined_call_operand.vmem [shape: f32[2,1,128], index: 7, kind: output, shape index: {1}]
  %s8 = inlined_call_operand.vmem [shape: s32[2,1,128], index: 8, kind: output, shape index: {2}]
  %9 = xla_tuple %s6, %s7, %s8
  %s10 = sld [smem:[#allocation0]]
  $region73: #{oh_model_forward.1} parent=0
    _
  %s12 = ssub.s32 1, %s10
  %s13 = scalar_select 0, %s12, %s10
  %s14 = sshll.u32 %s0, 4
  %s15 = int_to_ptr.vmem [resolvable:$true] %s14
  %17 = dma.vmem_to_smem %s15, 16, [#allocation4], [#allocation3]
  %s18 = sshll.u32 %s1, 4
  %s19 = int_to_ptr.vmem [resolvable:$true] %s18
  %21 = dma.vmem_to_smem %s19, 16, [#allocation5], [#allocation3]
  %22 = dma.done [#allocation3], 32
  %23 = sfence
  $region1: #{oh_model_forward.1} parent=0
    #allocation6 [shape = 'u8[1024]{0}', space=vmem, size = 0x400, scoped, tag = 'output window, operand 0']
    #allocation7 [shape = 's32[2]{0}', space=sflag, size = 0x8, scoped, tag = 'scoped memory for oh_model_forward.1']
    %24 = vsyncpa [#allocation7], 0
    %s25 = scalar_lea.sflag [#allocation7], 1
    %26 = vsyncpa %s25, 0
    loop: start=0, step=1, limit=18
    $region2: #{oh_model_forward.1} parent=1 // loop_pre_header
      _
    $region3: #{oh_model_forward.1} parent=1 // loop_header
      %s28 = sphi 0, %s32
      %p29 = scmp.ge.s32.totalorder %s28, 18
      %s35 = sphi 0, %s47
      %s36 = sphi 0, %s43
      %s37 = sphi 0, %s35
      %s38 = sphi 0, %s36
      %s39 = sphi 0, %s37
      %s40 = sphi 0, %s38
      %s56 = sphi 0, %s58
      %s59 = sphi 0, %s56
      %s60 = sphi 0, %s59
      %s76 = sphi 0, %s60
      %s80 = sphi 0, %s80
      %s82 = sphi 0, %s80
      %s83 = sphi 0, %s82
      %s97 = sphi 0, %s83
      %s103 = sphi 0, %s105
      %s106 = sphi 0, %s103
      %s107 = sphi 0, %s106
      %s123 = sphi 0, %s107
      %s127 = sphi 0, %s127
      %s129 = sphi 0, %s127
      %s130 = sphi 0, %s129
      %s144 = sphi 0, %s130
      %s150 = sphi 0, %s152
      %s153 = sphi 0, %s150
      %s154 = sphi 0, %s153
      %s170 = sphi 0, %s154
      %s176 = sphi 0, %s178
      %s179 = sphi 0, %s176
      %s180 = sphi 0, %s179
      %s196 = sphi 0, %s180
      %s202 = sphi 0, %s204
      %s205 = sphi 0, %s202
      %s206 = sphi 0, %s205
      %s222 = sphi 0, %s206
    $region4: #{oh_model_forward.1} parent=1 // loop_header_branch
      %31 = sbr.rel (%p29) target = $region8
    $region5: #{oh_model_forward.1} parent=1 // loop_body
      %s33 = ssub.s32 %s28, 1
      %s34 = ssub.s32 %s28, 2
      %s41 = sadd.s32 1, %s36
      %p42 = scmp.ge.s32.totalorder %s41, 8
      %s43 = scalar_select %p42, 0, %s41
      %s44 = sadd.s32 1, %s35
      %s45 = scalar_select %p42, %s44, %s35
      %p46 = scmp.ge.s32.totalorder %s45, 2
      %s47 = scalar_select %p46, 0, %s45
      %s48 = smul.u32 %s35, 8
      %s49 = sadd.s32 %s48, %s36
      %s50 = sld [smem:[#allocation4 + %s49]]
      %s51 = smul.u32 %s47, 8
      %s52 = sadd.s32 %s51, %s43
      %s53 = sld [smem:[#allocation4 + %s52]]
      %s54 = ssub.s32 %s50, %s53
      %p55 = scmp.eq.s32.totalorder %s54, 0
      %s57 = sadd.s32 %s56, 1
      %s58 = scalar_select %p55, %s56, %s57
      %p61 = pneg %p55
      %p62 = scmp.eq.s32.totalorder %s28, 15
      %p63 = por %p61, %p62
      %p64 = scmp.ne.s32.totalorder %s56, %s59
      %p65 = scmp.eq.s32.totalorder %s28, 0
      %p66 = por %p64, %p65
      %p67 = scmp.ne.s32.totalorder %s56, %s59
      %p68 = scmp.eq.s32.totalorder %s33, 15
      %p69 = por %p67, %p68
      %p70 = scmp.ne.s32.totalorder %s59, %s60
      %p71 = scmp.eq.s32.totalorder %s33, 0
      %p72 = por %p70, %p71
      %p73 = scmp.ne.s32.totalorder %s59, %s60
      %p74 = scmp.eq.s32.totalorder %s34, 15
      %p75 = por %p73, %p74
      %p77 = scmp.ne.s32.totalorder %s60, %s76
      %p78 = scmp.eq.s32.totalorder %s34, 0
      %p79 = por %p77, %p78
      %s81 = sadd.s32 %s80, 1
      %p84 = scmp.eq.s32.totalorder %s28, 15
      %p85 = scmp.ne.s32.totalorder %s80, %s82
      %p86 = scmp.eq.s32.totalorder %s28, 0
      %p87 = por %p85, %p86
      %p88 = scmp.ne.s32.totalorder %s80, %s82
      %p89 = scmp.eq.s32.totalorder %s33, 15
      %p90 = por %p88, %p89
      %p91 = scmp.ne.s32.totalorder %s82, %s83
      %p92 = scmp.eq.s32.totalorder %s33, 0
      %p93 = por %p91, %p92
      %p94 = scmp.ne.s32.totalorder %s82, %s83
      %p95 = scmp.eq.s32.totalorder %s34, 15
      %p96 = por %p94, %p95
      %p98 = scmp.ne.s32.totalorder %s83, %s97
      %p99 = scmp.eq.s32.totalorder %s34, 0
      %p100 = por %p98, %p99
      %s101 = ssub.s32 %s36, %s43
      %p102 = scmp.eq.s32.totalorder %s101, 0
      %s104 = sadd.s32 %s103, 1
      %s105 = scalar_select %p102, %s103, %s104
      %p108 = pneg %p102
      %p109 = scmp.eq.s32.totalorder %s28, 15
      %p110 = por %p108, %p109
      %p111 = scmp.ne.s32.totalorder %s103, %s106
      %p112 = scmp.eq.s32.totalorder %s28, 0
      %p113 = por %p111, %p112
      %p114 = scmp.ne.s32.totalorder %s103, %s106
      %p115 = scmp.eq.s32.totalorder %s33, 15
      %p116 = por %p114, %p115
      %p117 = scmp.ne.s32.totalorder %s106, %s107
      %p118 = scmp.eq.s32.totalorder %s33, 0
      %p119 = por %p117, %p118
      %p120 = scmp.ne.s32.totalorder %s106, %s107
      %p121 = scmp.eq.s32.totalorder %s34, 15
      %p122 = por %p120, %p121
      %p124 = scmp.ne.s32.totalorder %s107, %s123
      %p125 = scmp.eq.s32.totalorder %s34, 0
      %p126 = por %p124, %p125
      %s128 = sadd.s32 %s127, 1
      %p131 = scmp.eq.s32.totalorder %s28, 15
      %p132 = scmp.ne.s32.totalorder %s127, %s129
      %p133 = scmp.eq.s32.totalorder %s28, 0
      %p134 = por %p132, %p133
      %p135 = scmp.ne.s32.totalorder %s127, %s129
      %p136 = scmp.eq.s32.totalorder %s33, 15
      %p137 = por %p135, %p136
      %p138 = scmp.ne.s32.totalorder %s129, %s130
      %p139 = scmp.eq.s32.totalorder %s33, 0
      %p140 = por %p138, %p139
      %p141 = scmp.ne.s32.totalorder %s129, %s130
      %p142 = scmp.eq.s32.totalorder %s34, 15
      %p143 = por %p141, %p142
      %p145 = scmp.ne.s32.totalorder %s130, %s144
      %p146 = scmp.eq.s32.totalorder %s34, 0
      %p147 = por %p145, %p146
      %s148 = ssub.s32 %s35, %s47
      %p149 = scmp.eq.s32.totalorder %s148, 0
      %s151 = sadd.s32 %s150, 1
      %s152 = scalar_select %p149, %s150, %s151
      %p155 = pneg %p149
      %p156 = scmp.eq.s32.totalorder %s28, 15
      %p157 = por %p155, %p156
      %p158 = scmp.ne.s32.totalorder %s150, %s153
      %p159 = scmp.eq.s32.totalorder %s28, 0
      %p160 = por %p158, %p159
      %p161 = scmp.ne.s32.totalorder %s150, %s153
      %p162 = scmp.eq.s32.totalorder %s33, 15
      %p163 = por %p161, %p162
      %p164 = scmp.ne.s32.totalorder %s153, %s154
      %p165 = scmp.eq.s32.totalorder %s33, 0
      %p166 = por %p164, %p165
      %p167 = scmp.ne.s32.totalorder %s153, %s154
      %p168 = scmp.eq.s32.totalorder %s34, 15
      %p169 = por %p167, %p168
      %p171 = scmp.ne.s32.totalorder %s154, %s170
      %p172 = scmp.eq.s32.totalorder %s34, 0
      %p173 = por %p171, %p172
      %s174 = ssub.s32 %s35, %s47
      %p175 = scmp.eq.s32.totalorder %s174, 0
      %s177 = sadd.s32 %s176, 1
      %s178 = scalar_select %p175, %s176, %s177
      %p181 = pneg %p175
      %p182 = scmp.eq.s32.totalorder %s28, 15
      %p183 = por %p181, %p182
      %p184 = scmp.ne.s32.totalorder %s176, %s179
      %p185 = scmp.eq.s32.totalorder %s28, 0
      %p186 = por %p184, %p185
      %p187 = scmp.ne.s32.totalorder %s176, %s179
      %p188 = scmp.eq.s32.totalorder %s33, 15
      %p189 = por %p187, %p188
      %p190 = scmp.ne.s32.totalorder %s179, %s180
      %p191 = scmp.eq.s32.totalorder %s33, 0
      %p192 = por %p190, %p191
      %p193 = scmp.ne.s32.totalorder %s179, %s180
      %p194 = scmp.eq.s32.totalorder %s34, 15
      %p195 = por %p193, %p194
      %p197 = scmp.ne.s32.totalorder %s180, %s196
      %p198 = scmp.eq.s32.totalorder %s34, 0
      %p199 = por %p197, %p198
      %s200 = ssub.s32 %s35, %s47
      %p201 = scmp.eq.s32.totalorder %s200, 0
      %s203 = sadd.s32 %s202, 1
      %s204 = scalar_select %p201, %s202, %s203
      %p207 = pneg %p201
      %p208 = scmp.eq.s32.totalorder %s28, 15
      %p209 = por %p207, %p208
      %p210 = scmp.ne.s32.totalorder %s202, %s205
      %p211 = scmp.eq.s32.totalorder %s28, 0
      %p212 = por %p210, %p211
      %p213 = scmp.ne.s32.totalorder %s202, %s205
      %p214 = scmp.eq.s32.totalorder %s33, 15
      %p215 = por %p213, %p214
      %p216 = scmp.ne.s32.totalorder %s205, %s206
      %p217 = scmp.eq.s32.totalorder %s33, 0
      %p218 = por %p216, %p217
      %p219 = scmp.ne.s32.totalorder %s205, %s206
      %p220 = scmp.eq.s32.totalorder %s34, 15
      %p221 = por %p219, %p220
      %p223 = scmp.ne.s32.totalorder %s206, %s222
      %p224 = scmp.eq.s32.totalorder %s34, 0
      %p225 = por %p223, %p224
      %p226 = scmp.le.s32.totalorder 1, %s28
      %p227 = scmp.lt.s32.totalorder %s28, 17
      %p228 = pnand %p226, %p227
      %p229 = pneg %p228
      // Predicated region
      $region9: #{oh_model_forward.1} parent=5 // pred_check
        _
      $region10: #{oh_model_forward.1} parent=5 // pred_check_branch
        %231 = sbr.rel (%p228) target = $region12
      $region11: #{oh_model_forward.1} parent=5 // pred_region
        %s232 = ssub.s32 %s28, 1
        // Predicated region
        $region13: #{oh_model_forward.1} parent=11 // pred_check
          %p233 = pneg %p93
        $region14: #{oh_model_forward.1} parent=11 // pred_check_branch
          %235 = sbr.rel (%p233) target = $region16
        $region15: #{oh_model_forward.1} parent=11 // pred_region
          _
        $region16: #{oh_model_forward.1} parent=11 // pred_fallthru
          _
        // Predicated region
        $region17: #{oh_model_forward.1} parent=11 // pred_check
          %p236 = pneg %p140
        $region18: #{oh_model_forward.1} parent=11 // pred_check_branch
          %238 = sbr.rel (%p236) target = $region20
        $region19: #{oh_model_forward.1} parent=11 // pred_region
          _
        $region20: #{oh_model_forward.1} parent=11 // pred_fallthru
          _
      $region12: #{oh_model_forward.1} parent=5 // pred_fallthru
        _
      %p239 = scmp.lt.s32.totalorder %s28, 16
      // Predicated region
      $region21: #{oh_model_forward.1} parent=5 // pred_check
        %p240 = pneg %p239
      $region22: #{oh_model_forward.1} parent=5 // pred_check_branch
        %242 = sbr.rel (%p240) target = $region24
      $region23: #{oh_model_forward.1} parent=5 // pred_region
        // Predicated region
        $region25: #{oh_model_forward.1} parent=23 // pred_check
          %p243 = pneg %p66
        $region26: #{oh_model_forward.1} parent=23 // pred_check_branch
          %245 = sbr.rel (%p243) target = $region28
        $region27: #{oh_model_forward.1} parent=23 // pred_region
          %s246 = smul.u32 %s35, 8
          %s247 = sadd.s32 %s246, %s36
          %s248 = sld [smem:[#allocation4 + %s247]]
          %p249 = scmp.lt.s32.totalorder %s248, 31
          %s250 = scalar_select %p249, %s248, 31
          %s251 = scalar_lea.vmem %s2, %s250
          %s252 = smul.u32 %s35, 8
          %s253 = sadd.s32 %s252, %s36
          %s254 = sld [smem:[#allocation4 + %s253]]
        $region28: #{oh_model_forward.1} parent=23 // pred_fallthru
          _
        // Predicated region
        $region29: #{oh_model_forward.1} parent=23 // pred_check
          %p255 = pneg %p113
        $region30: #{oh_model_forward.1} parent=23 // pred_check_branch
          %257 = sbr.rel (%p255) target = $region32
        $region31: #{oh_model_forward.1} parent=23 // pred_region
          %p258 = scmp.lt.s32.totalorder %s36, 7
          %s259 = scalar_select %p258, %s36, 7
          %s260 = smul.addr %s259, 4
          %s261 = smul.addr %s260, 4
          %s262 = scalar_lea.vmem %s4, %s261
        $region32: #{oh_model_forward.1} parent=23 // pred_fallthru
          _
      $region24: #{oh_model_forward.1} parent=5 // pred_fallthru
        _
      %p263 = scmp.le.s32.totalorder 1, %s28
      %p264 = scmp.lt.s32.totalorder %s28, 17
      %p265 = pnand %p263, %p264
      %p266 = pneg %p265
      // Predicated region
      $region33: #{oh_model_forward.1} parent=5 // pred_check
        _
      $region34: #{oh_model_forward.1} parent=5 // pred_check_branch
        %268 = sbr.rel (%p265) target = $region36
      $region35: #{oh_model_forward.1} parent=5 // pred_region
        %s269 = ssub.s32 %s28, 1
        %s270 = smul.u32 %s37, 8
        %s271 = sadd.s32 %s270, %s38
        %s272 = sld [smem:[#allocation4 + %s271]]
        %p273 = scmp.lt.s32.totalorder %s272, 31
        %s274 = scalar_select %p273, %s272, 31
        %s275 = scalar_lea.vmem %s2, %s274
        %p276 = pneg %p72
        %p277 = pneg %p69
        %p278 = pneg %p93
        %p279 = pneg %p90
        %p280 = scmp.lt.s32.totalorder %s38, 7
        %s281 = scalar_select %p280, %s38, 7
        %s282 = smul.addr %s281, 4
        %s283 = smul.addr %s282, 4
        %s284 = scalar_lea.vmem %s4, %s283
        %p285 = pneg %p119
        %p286 = pneg %p116
        %p287 = pneg %p140
        %p288 = pneg %p137
        %p289 = pneg %p166
        %p290 = pneg %p163
        %s291 = sand.u32 %s153, 1
        %s292 = scalar_lea.sflag [#allocation7], %s291
        %s293 = sand.u32 %s153, 1
        %s294 = scalar_lea.vmem [#allocation6], %s293
        %p295 = pneg %p192
        %p296 = pneg %p189
        %p297 = scmp.lt.s32.totalorder %s37, 1
        %s298 = scalar_select %p297, %s37, 1
        %s299 = scalar_lea.vmem %s7, %s298
        %p300 = pneg %p218
        %p301 = pneg %p215
        %p302 = scmp.lt.s32.totalorder %s37, 1
        %s303 = scalar_select %p302, %s37, 1
        %s304 = scalar_lea.vmem %s8, %s303
        %s305 = smul.u32 %s37, 8
        %s306 = sadd.s32 %s305, %s38
        %s307 = sld [smem:[#allocation4 + %s306]]
        %p308 = scmp.lt.s32.totalorder %s307, 31
        %s309 = scalar_select %p308, %s307, 31
        %s310 = scalar_lea.vmem %s2, %s309
        %s311 = smul.u32 %s37, 8
        %s312 = sadd.s32 %s311, %s38
        %s313 = sld [smem:[#allocation4 + %s312]]
        %p314 = scmp.lt.s32.totalorder %s38, 7
        %s315 = scalar_select %p314, %s38, 7
        %s316 = smul.addr %s315, 4
        %s317 = smul.addr %s316, 4
        %s318 = scalar_lea.vmem %s4, %s317
        %p319 = scmp.lt.s32.totalorder %s37, 1
        %s320 = scalar_select %p319, %s37, 1
        %s321 = scalar_lea.vmem %s7, %s320
        %p322 = scmp.lt.s32.totalorder %s37, 1
        %s323 = scalar_select %p322, %s37, 1
        %s324 = scalar_lea.vmem %s8, %s323
        %p326 = scmp.eq.s32.totalorder %s38, 0
        // Predicated region
        $region37: #{oh_model_forward.1} parent=35 // pred_check
          %p327 = pneg %p326
        $region38: #{oh_model_forward.1} parent=35 // pred_check_branch
          %329 = sbr.rel (%p327) target = $region40
        $region39: #{oh_model_forward.1} parent=35 // pred_region
          %v330 = vld [vmem:[%s5] sm:$0x1]
          %vm331 = vcmask 24576
          %332 = vst.msk [vmem:[#allocation2] sm:$0x1] %vm331, %v330
        $region40: #{oh_model_forward.1} parent=35 // pred_fallthru
          _
        %v333 = vld [vmem:[%s310] sm:$0x1]
        %v334 = vunpack.c.l.bf16 %v333
        %v335 = vld [vmem:[%s3] sm:$0x1]
        %v336 = vadd.f32 %v334, %v335
        %v337 = vmax.f32 %v336, 0.0
        %v338 = vpack.c.bf16 %v337, %v337
        %v339 = vld [vmem:[%s318] sm:$0xf]
        %v340 = vld [vmem:[%s318 + $0x4] sm:$0xf]
        %v341 = vld [vmem:[%s318 + $0x8] sm:$0xf]
        %v342 = vld [vmem:[%s318 + $0xc] sm:$0xf]
        %v347 = vunpack.c.l.b16 %v339
        %v348 = vunpack.c.l.b16 %v340
        %v349 = vunpack.c.l.b16 %v341
        %v350 = vunpack.c.l.b16 %v342
        %v351 = vpack.c.b16 %v348, %v347
        %v352 = vpack.c.b16 %v350, %v349
        %vm355 = vcmask 261120
        %v357 = vsel %vm355, %v338, 0
        %359 = vmatprep.subr.bf16.mxu0 0
        %360 = vmatpush1.bf16.msra.mxu0 %v351
        %361 = vmatprep.subr.bf16.mxu0 0
        %362 = vmatpush1.bf16.msra.mxu0 %v352
        %363 = vmatprep.subr.bf16.mxu0 0
        %364 = vmatpush1.bf16.msra.mxu0 0
        %365 = vmatprep.subr.bf16.mxu0 0
        %366 = vmatpush1.bf16.msra.mxu0 0
        %367 = vmatprep.subr.bf16.mxu0 0
        %368 = vmatpush1.bf16.msra.mxu0 0
        %369 = vmatprep.subr.bf16.mxu0 0
        %370 = vmatpush1.bf16.msra.mxu0 0
        %371 = vmatprep.subr.bf16.mxu0 0
        %372 = vmatpush1.bf16.msra.mxu0 0
        %373 = vmatprep.subr.bf16.mxu0 0
        %374 = vmatpush1.bf16.msra.mxu0 0
        %375 = vmatprep.subr.bf16.mxu0 0
        %376 = vmatpush1.bf16.msra.mxu0 0
        %377 = vmatprep.subr.bf16.mxu0 0
        %378 = vmatpush1.bf16.msra.mxu0 0
        %379 = vmatprep.subr.bf16.mxu0 0
        %380 = vmatpush1.bf16.msra.mxu0 0
        %381 = vmatprep.subr.bf16.mxu0 0
        %382 = vmatpush1.bf16.msra.mxu0 0
        %383 = vmatprep.subr.bf16.mxu0 0
        %384 = vmatpush1.bf16.msra.mxu0 0
        %385 = vmatprep.subr.bf16.mxu0 0
        %386 = vmatpush1.bf16.msra.mxu0 0
        %387 = vmatprep.subr.bf16.mxu0 0
        %388 = vmatpush1.bf16.msra.mxu0 0
        %389 = vmatprep.subr.bf16.mxu0 0
        %390 = vmatpush1.bf16.msra.mxu0 0
        %391 = vmatprep.mubr.bf16.mxu0 0
        %392 = vmatmul.mubr.bf16.gmra.mrb[0].mxu0 %v357
        %v393 = vpop.f32.mrb[0].mxu0
        %v394 = vadd.f32 0.0, %v393
        %v395 = vpop.f32.mrb[0].mxu0
        %v396 = vpop.f32.mrb[0].mxu0
        %v397 = vpop.f32.mrb[0].mxu0
        %398 = vdwg.mxu0
        %v399 = vld [vmem:[#allocation2] sm:$0x1]
        %v400 = vadd.f32 %v399, %v394
        %vm401 = vcmask 24576
        %402 = vst.msk [vmem:[#allocation2] sm:$0x1] %vm401, %v400
        %p403 = scmp.eq.s32.totalorder %s38, 7
        // Predicated region
        $region41: #{oh_model_forward.1} parent=35 // pred_check
          %p404 = pneg %p403
        $region42: #{oh_model_forward.1} parent=35 // pred_check_branch
          %406 = sbr.rel (%p404) target = $region44
        $region43: #{oh_model_forward.1} parent=35 // pred_region
          %v407 = vld [vmem:[#allocation2] sm:$0x1]
          %v408 = vlaneseq
          %v409 = vand.u32 %v408, 127
          %v410 = vsel %vm401, %v407, -inf
          %411 = vmax.xlane.f32.xlu0 %v410
          %v412 = vpop.xlane.xlu0 %411
          %v413 = vsub.f32 %v407, %v412
          %v414 = vmul.f32 %v413, 1.442695
          %v415 = vpow.pop %v414
          %v416 = vsel %vm401, %v415, 0.0
          %417 = vadd.xlane.f32.xlu0 %v416
          %v418 = vpop.xlane.xlu0 %417
          %v419 = vlog2.pop %v418
          %v420 = vmul.f32 %v419, 0.6931472
          %v421 = vadd.f32 %v420, %v412
          %s422 = sld [smem:[#allocation5 + %s37]]
          %v423 = vstv %s422
          %vm424 = vcmp.eq.s32.totalorder %v409, %v423
          %v425 = vsel %vm424, %v407, 0.0
          %v426 = vsel %vm401, %v425, 0.0
          %427 = vadd.xlane.f32.xlu0 %v426
          %v428 = vpop.xlane.xlu0 %427
          %v429 = vsub.f32 %v421, %v428
          %430 = vst [vmem:[%s321] sm:$0x1] %v429
          %vm431 = vcmp.eq.f32.partialorder %v407, %v412
          %v432 = vsel %vm431, %v409, 4
          %v433 = vsel %vm401, %v432, 2147483647
          %v434 = vand.u32 %v433, 65535
          %v435 = vshra.s32 %v433, 16
          %v436 = vcvt.s32.f32 %v434
          %v437 = vcvt.s32.f32 %v435
          %438 = vmin.xlane.f32.xlu0 %v437
          %v439 = vpop.xlane.xlu0 %438
          %vm440 = vcmp.eq.f32.partialorder %v437, %v439
          %v441 = vsel %vm440, %v436, inf
          %442 = vmin.xlane.f32.xlu0 %v441
          %v443 = vpop.xlane.xlu0 %442
          %v444 = vcvt.f32.s32 %v443
          %v445 = vcvt.f32.s32 %v439
          %v446 = vshll.u32 %v445, 16
          %v447 = vadd.s32 %v446, %v444
          %448 = vst [vmem:[%s324] sm:$0x1] %v447
          %449 = vst [vmem:[%s294] sm:$0x1] 0.0
          %450 = vst.msk [vmem:[%s294] sm:$0x1] %vm401, %v407
        $region44: #{oh_model_forward.1} parent=35 // pred_fallthru
          _
        %s451 = sand.u32 %s153, 1
        %s452 = scalar_lea.sflag [#allocation7], %s451
        %s453 = sand.u32 %s153, 1
        %s454 = scalar_lea.vmem [#allocation6], %s453
        %p455 = scmp.lt.s32.totalorder %s37, 1
        %s456 = scalar_select %p455, %s37, 1
        %s457 = scalar_lea.vmem %s7, %s456
        %p458 = scmp.lt.s32.totalorder %s37, 1
        %s459 = scalar_select %p458, %s37, 1
        %s460 = scalar_lea.vmem %s8, %s459
        // Predicated region
        $region45: #{oh_model_forward.1} parent=35 // pred_check
          %p461 = pneg %p163
        $region46: #{oh_model_forward.1} parent=35 // pred_check_branch
          %463 = sbr.rel (%p461) target = $region48
        $region47: #{oh_model_forward.1} parent=35 // pred_region
          %s465 = ssub.s32 16, 16
          %466 = vsyncadd %s452, %s465
          %s467 = smul.addr %s37, 16
          %s468 = scalar_lea.hbm %s6, %s467
          %s470 = sshll.u32 %s454, 4
          %s471 = int_to_ptr.vmem [resolvable:$true] %s470
          %473 = dma.vmem_to_hbm [thread:$0]  %s471, 16, %s468, %s452
        $region48: #{oh_model_forward.1} parent=35 // pred_fallthru
          _
        // Predicated region
        $region49: #{oh_model_forward.1} parent=35 // pred_check
          %p474 = pneg %p189
        $region50: #{oh_model_forward.1} parent=35 // pred_check_branch
          %476 = sbr.rel (%p474) target = $region52
        $region51: #{oh_model_forward.1} parent=35 // pred_region
          _
        $region52: #{oh_model_forward.1} parent=35 // pred_fallthru
          _
        // Predicated region
        $region53: #{oh_model_forward.1} parent=35 // pred_check
          %p477 = pneg %p215
        $region54: #{oh_model_forward.1} parent=35 // pred_check_branch
          %479 = sbr.rel (%p477) target = $region56
        $region55: #{oh_model_forward.1} parent=35 // pred_region
          _
        $region56: #{oh_model_forward.1} parent=35 // pred_fallthru
          _
      $region36: #{oh_model_forward.1} parent=5 // pred_fallthru
        _
      %p480 = scmp.le.s32.totalorder 2, %s28
      // Predicated region
      $region57: #{oh_model_forward.1} parent=5 // pred_check
        %p481 = pneg %p480
      $region58: #{oh_model_forward.1} parent=5 // pred_check_branch
        %483 = sbr.rel (%p481) target = $region60
      $region59: #{oh_model_forward.1} parent=5 // pred_region
        %s484 = ssub.s32 %s28, 2
        // Predicated region
        $region61: #{oh_model_forward.1} parent=59 // pred_check
          %p485 = pneg %p169
        $region62: #{oh_model_forward.1} parent=59 // pred_check_branch
          %487 = sbr.rel (%p485) target = $region64
        $region63: #{oh_model_forward.1} parent=59 // pred_region
          %s488 = sand.u32 %s154, 1
          %s489 = scalar_lea.sflag [#allocation7], %s488
          %s490 = sand.u32 %s154, 1
          %s491 = scalar_lea.vmem [#allocation6], %s490
          %492 = dma.done %s489, 16
        $region64: #{oh_model_forward.1} parent=59 // pred_fallthru
          _
        // Predicated region
        $region65: #{oh_model_forward.1} parent=59 // pred_check
          %p493 = pneg %p195
        $region66: #{oh_model_forward.1} parent=59 // pred_check_branch
          %495 = sbr.rel (%p493) target = $region68
        $region67: #{oh_model_forward.1} parent=59 // pred_region
          %p496 = scmp.lt.s32.totalorder %s39, 1
          %s497 = scalar_select %p496, %s39, 1
          %s498 = scalar_lea.vmem %s7, %s497
        $region68: #{oh_model_forward.1} parent=59 // pred_fallthru
          _
        // Predicated region
        $region69: #{oh_model_forward.1} parent=59 // pred_check
          %p499 = pneg %p221
        $region70: #{oh_model_forward.1} parent=59 // pred_check_branch
          %501 = sbr.rel (%p499) target = $region72
        $region71: #{oh_model_forward.1} parent=59 // pred_region
          %p502 = scmp.lt.s32.totalorder %s39, 1
          %s503 = scalar_select %p502, %s39, 1
          %s504 = scalar_lea.vmem %s8, %s503
        $region72: #{oh_model_forward.1} parent=59 // pred_fallthru
          _
      $region60: #{oh_model_forward.1} parent=5 // pred_fallthru
        _
    $region6: #{oh_model_forward.1} parent=1 // loop_footer
      %s32 = sadd.s32 1, %s28
    $region7: #{oh_model_forward.1} parent=1 // loop_footer_branch
      %27 = sbr.rel target = $region3
    $region8: #{oh_model_forward.1} parent=1 // loop_exit
      _
    %505 = vsyncpa [#allocation7], 1
    %s506 = scalar_lea.sflag [#allocation7], 1
    %507 = vsyncpa %s506, 1

</llo_original>
